<compile_context>
chip_gen: v5e
topology: v5e:2x2
jax: 0.10.0
libtpu: 0.0.40
codegen_flags: <defaults>
</compile_context>

<pallas_src>
import jax
import jax.numpy as jnp
from jax.experimental import pallas as pl
from jax.experimental.pallas import tpu as pltpu

_LANE = 128      # lane width: hidden/output feature dims padded to multiples
_SUBLANE = 8     # sublane width: row (batch*seq) dim padded to a multiple


def _round_up(x, m):
    return ((x + m - 1) // m) * m


def _vmem_capacity_bytes():
    """Physical VMEM per TensorCore; conservative 64 MiB fallback (v7x)."""
    try:
        return int(pltpu.get_tpu_info().vmem_capacity_bytes)
    except Exception:
        return 64 * 1024 * 1024


def _num_tensorcores():
    """2 TCs per chip on v7x; 1 on v5e/v6e (grid is a serial loop there)."""
    try:
        kind = jax.devices()[0].device_kind.lower()
        return 2 if "7" in kind else 1
    except Exception:
        return 1


def _choose_tile_m(m8, stream_bytes_per_row, resident_bytes, act_bytes_per_row):
    """Largest M tile that fits the VMEM budget; split only for dual-TC chips."""
    budget = int(_vmem_capacity_bytes() * 0.75)
    tm = _SUBLANE
    for cand in (1024, 512, 256, 128, 64, 32, 16, 8):
        if cand > m8:
            continue
        need = (resident_bytes                      # single-buffered weights/biases
                + 2 * cand * stream_bytes_per_row   # double-buffered x/out tiles
                + cand * act_bytes_per_row)         # intermediate activations (f32)
        if need <= budget:
            tm = cand
            break
    # Only on dual-TC chips (v7x) do >=2 grid blocks help; on single-TC
    # v5e/v6e extra blocks just add per-step overhead.
    if _num_tensorcores() >= 2 and m8 > _SUBLANE and -(-m8 // tm) < 2:
        tm = max(_SUBLANE, _round_up((m8 + 1) // 2, _SUBLANE))
    return tm


def _make_fused_kernel(num_layers):
    """Build kernel(x_ref, w0_ref, b0_ref, w1_ref, b1_ref, ..., o_ref)."""

    def kernel(*refs):
        x_ref = refs[0]
        o_ref = refs[-1]
        h = x_ref[...]
        for l in range(num_layers):
            w_ref = refs[1 + 2 * l]
            b_ref = refs[2 + 2 * l]
            # MXU matmul with f32 accumulation; bias + ReLU fused so each layer
            # is a single pass; intermediates never leave VMEM/vregs.
            y = jnp.dot(h, w_ref[...], preferred_element_type=jnp.float32)
            a = jnp.maximum(y + b_ref[...].astype(jnp.float32), 0.0)
            # Cast back to compute dtype only when feeding the next matmul.
            h = a.astype(w_ref.dtype) if l + 1 < num_layers else a
        o_ref[...] = h.astype(o_ref.dtype)

    return kernel


def init_fcnet_params(key, dims):
    """Mimic nn.Linear defaults + weight_norm(dim=None) init.

    For layer i: V has shape [out, in]; scalar g = ||V||_F (so effective weight
    equals V at init, as PyTorch's weight_norm does); bias ~ U(-1/sqrt(in), ...).
    """
    params = []
    for i in range(len(dims) - 1):
        in_dim, out_dim = dims[i], dims[i + 1]
        key, kw, kb = jax.random.split(key, 3)
        bound = 1.0 / jnp.sqrt(in_dim)
        v = jax.random.uniform(kw, (out_dim, in_dim), jnp.float32, -bound, bound)
        g = jnp.linalg.norm(v)  # scalar Frobenius norm (weight_norm dim=None)
        b = jax.random.uniform(kb, (out_dim,), jnp.float32, -bound, bound)
        params.append({"v": v, "g": g, "b": b})
    return params


def prepare_fcnet_params(params, compute_dtype=jnp.float32, lane_multiple=_LANE):
    """Fold weight_norm ONCE and pad to TPU-friendly shapes.

    Layer 0 keeps K = true input dim (so x needs NO feature padding); every
    layer's output dim is padded to `lane_multiple` (128; use 256 on v7x for
    dims that land between 128-multiples).  Padded weight/bias entries are
    zero, so padded activation columns are exactly zero through ReLU -> exact.

    Returns (prepared, out_dim) with prepared = [w0, b0, w1, b1, ...]:
      w_l: [K_l, N_l_pad]  = (g/||V||_F * V)^T zero-padded
      b_l: [1, N_l_pad]    zero-padded bias (f32)
    """
    prepared = []
    out_dim = None
    prev_pad = None  # padded output width of the previous layer
    for p in params:
        v, g, b = p["v"], p["g"], p["b"]
        out_dim, in_dim = v.shape
        # weight_norm(dim=None): W = g * V / ||V||_F  (scalar g, Frobenius norm)
        w_eff = (g / jnp.linalg.norm(v)) * v                   # [out, in]
        w_t = w_eff.T.astype(compute_dtype)                    # [in, out]
        k_pad = in_dim if prev_pad is None else prev_pad
        n_pad = _round_up(out_dim, lane_multiple)
        w_p = jnp.zeros((k_pad, n_pad), compute_dtype).at[:in_dim, :out_dim].set(w_t)
        b_p = jnp.zeros((1, n_pad), jnp.float32).at[0, :out_dim].set(b)
        prepared.append(w_p)
        prepared.append(b_p)
        prev_pad = n_pad
    return prepared, out_dim


def fcnet_forward(prepared, out_dim, x, compute_dtype=jnp.float32, out_dtype=None):
    """x: [batch, seq, dims[0]] -> [batch, seq, dims[-1]].

    One fused pallas_call over an M-tiled ("parallel") grid; all layer weights
    and biases live in VMEM as single-buffered whole arrays, and intermediate
    activations never touch HBM.
    """
    B, S, D = x.shape
    M = B * S
    num_layers = len(prepared) // 2
    out_dtype = x.dtype if out_dtype is None else out_dtype

    n_last_pad = prepared[-2].shape[1]
    max_n_pad = max(prepared[2 * l].shape[1] for l in range(num_layers))

    in_itemsize = jnp.dtype(compute_dtype).itemsize
    out_itemsize = jnp.dtype(out_dtype).itemsize

    # x is streamed with its TRUE feature width (no K padding, no padded HBM
    # copy).  Only pad rows to a sublane multiple when strictly required.
    x2d = x.reshape(M, D).astype(compute_dtype)
    m8 = _round_up(M, _SUBLANE)
    if m8 != M:
        x2d = jnp.pad(x2d, ((0, m8 - M), (0, 0)))

    resident_bytes = sum(int(a.size) * a.dtype.itemsize for a in prepared)
    stream_bytes_per_row = D * in_itemsize + n_last_pad * out_itemsize
    act_bytes_per_row = 2 * max_n_pad * 4  # generous f32 intermediate scratch

    tm = _choose_tile_m(m8, stream_bytes_per_row, resident_bytes, act_bytes_per_row)
    grid_m = pl.cdiv(m8, tm)  # partial last block handled by Pallas (rows indep.)

    need = (resident_bytes + 2 * tm * stream_bytes_per_row
            + tm * act_bytes_per_row + (4 << 20))
    vmem_limit = int(min(_vmem_capacity_bytes() * 0.9, max(need, 32 << 20)))

    flops = 2 * M * sum(prepared[2 * l].shape[0] * prepared[2 * l].shape[1]
                        for l in range(num_layers))
    bytes_accessed = (m8 * D * in_itemsize + resident_bytes
                      + m8 * n_last_pad * out_itemsize)

    in_specs = [pl.BlockSpec((tm, D), lambda i: (i, 0))]
    for _ in range(num_layers):
        # Whole-array, single-buffered VMEM residency for weights and biases:
        # fetched once before the grid, no per-step DMA, no double buffer.
        in_specs.append(pl.BlockSpec(memory_space=pltpu.MemorySpace.VMEM))
        in_specs.append(pl.BlockSpec(memory_space=pltpu.MemorySpace.VMEM))

    out = pl.pallas_call(
        _make_fused_kernel(num_layers),
        out_shape=jax.ShapeDtypeStruct((m8, n_last_pad), out_dtype),
        grid=(grid_m,),
        in_specs=in_specs,
        out_specs=pl.BlockSpec((tm, n_last_pad), lambda i: (i, 0)),
        compiler_params=pltpu.CompilerParams(
            dimension_semantics=("parallel",),
            vmem_limit_bytes=vmem_limit,
        ),
        cost_estimate=pl.CostEstimate(
            flops=flops, transcendentals=0, bytes_accessed=bytes_accessed),
    )(x2d, *prepared)

    # Downstream consumers that can take the padded (m8, n_last_pad) slab
    # should do so; this slice is only for the torch-shaped reference check.
    return out[:M, :out_dim].reshape(B, S, out_dim)


if __name__ == "__main__":
    key = jax.random.PRNGKey(0)
    dims = [32, 64, 32]          # FCNet(dims=[32, 64, 32], act='ReLU', dropout=0)
    batch, seq = 2, 8

    kx, kp = jax.random.split(key)
    x = jax.random.normal(kx, (batch, seq, dims[0]), jnp.float32)
    params = init_fcnet_params(kp, dims)

    # Fold weight_norm + pad once (outside the forward path).
    # For large shapes on v6e/v7x, pass compute_dtype=jnp.bfloat16 here
    # (and lane_multiple=256 on v7x); the allclose check below is f32-only.
    prepared, out_dim = prepare_fcnet_params(params, compute_dtype=jnp.float32)

    out = fcnet_forward(prepared, out_dim, x)
    out = jax.block_until_ready(out)

    # Pure-JAX reference check of the same semantics.
    ref = x.reshape(batch * seq, dims[0])
    for p in params:
        w_eff = (p["g"] / jnp.linalg.norm(p["v"])) * p["v"]
        ref = jnp.maximum(ref @ w_eff.T + p["b"], 0.0)
    ref = ref.reshape(batch, seq, dims[-1])

    assert out.shape == (batch, seq, dims[-1])
    assert jnp.allclose(out, ref, atol=1e-5, rtol=1e-5)

    print("KERNEL_OK")
</pallas_src>

<mosaic_0001>
module attributes {stable_mosaic.version = 11 : i64} {
  func.func @kernel(%arg0: i32, %arg1: memref<16x32xf32, #tpu.memory_space<vmem>>, %arg2: memref<32x128xf32, #tpu.memory_space<vmem>>, %arg3: memref<1x128xf32, #tpu.memory_space<vmem>>, %arg4: memref<128x128xf32, #tpu.memory_space<vmem>>, %arg5: memref<1x128xf32, #tpu.memory_space<vmem>>, %arg6: memref<16x128xf32, #tpu.memory_space<vmem>>) attributes {dimension_semantics = [#tpu.dimension_semantics<parallel>], iteration_bounds = array<i64: 1>, scalar_prefetch = 0 : i64, scratch_operands = 0 : i64, tpu.core_type = #tpu.core_type<tc>, window_params = [{transform_indices = @transform_0, window_bounds = array<i64: 16, 32>}, {pipeline_mode = #tpu.pipeline_mode<synchronous>, transform_indices = @transform_1, window_bounds = array<i64: 32, 128>}, {pipeline_mode = #tpu.pipeline_mode<synchronous>, transform_indices = @transform_2, window_bounds = array<i64: 1, 128>}, {pipeline_mode = #tpu.pipeline_mode<synchronous>, transform_indices = @transform_3, window_bounds = array<i64: 128, 128>}, {pipeline_mode = #tpu.pipeline_mode<synchronous>, transform_indices = @transform_4, window_bounds = array<i64: 1, 128>}, {transform_indices = @transform_5, window_bounds = array<i64: 16, 128>}]} {
    %c0 = arith.constant 0 : index
    %c0_0 = arith.constant 0 : index
    %0 = vector.load %arg1[%c0, %c0_0] : memref<16x32xf32, #tpu.memory_space<vmem>>, vector<16x32xf32>
    %c0_1 = arith.constant 0 : index
    %c0_2 = arith.constant 0 : index
    %1 = vector.load %arg2[%c0_1, %c0_2] : memref<32x128xf32, #tpu.memory_space<vmem>>, vector<32x128xf32>
    %cst = arith.constant dense<0.000000e+00> : vector<16x128xf32>
    %2 = tpu.matmul %0, %1, %cst {dimension_numbers = #tpu.dot_dimension_numbers<[1], [0], [0], [1], [0, 0, 1, 1], [], []>} : vector<16x32xf32>, vector<32x128xf32>, vector<16x128xf32> -> vector<16x128xf32>
    %c0_3 = arith.constant 0 : index
    %c0_4 = arith.constant 0 : index
    %3 = vector.load %arg3[%c0_3, %c0_4] : memref<1x128xf32, #tpu.memory_space<vmem>>, vector<1x128xf32>
    %4 = vector.broadcast %3 : vector<1x128xf32> to vector<16x128xf32>
    %5 = arith.addf %2, %4 : vector<16x128xf32>
    %cst_5 = arith.constant 0.000000e+00 : f32
    %6 = vector.broadcast %cst_5 : f32 to vector<16x128xf32>
    %7 = arith.maximumf %5, %6 : vector<16x128xf32>
    %c0_6 = arith.constant 0 : index
    %c0_7 = arith.constant 0 : index
    %8 = vector.load %arg4[%c0_6, %c0_7] : memref<128x128xf32, #tpu.memory_space<vmem>>, vector<128x128xf32>
    %cst_8 = arith.constant dense<0.000000e+00> : vector<16x128xf32>
    %9 = tpu.matmul %7, %8, %cst_8 {dimension_numbers = #tpu.dot_dimension_numbers<[1], [0], [0], [1], [0, 0, 1, 1], [], []>} : vector<16x128xf32>, vector<128x128xf32>, vector<16x128xf32> -> vector<16x128xf32>
    %c0_9 = arith.constant 0 : index
    %c0_10 = arith.constant 0 : index
    %10 = vector.load %arg5[%c0_9, %c0_10] : memref<1x128xf32, #tpu.memory_space<vmem>>, vector<1x128xf32>
    %11 = vector.broadcast %10 : vector<1x128xf32> to vector<16x128xf32>
    %12 = arith.addf %9, %11 : vector<16x128xf32>
    %cst_11 = arith.constant 0.000000e+00 : f32
    %13 = vector.broadcast %cst_11 : f32 to vector<16x128xf32>
    %14 = arith.maximumf %12, %13 : vector<16x128xf32>
    %c0_12 = arith.constant 0 : index
    %c0_13 = arith.constant 0 : index
    %15 = vector.load %arg6[%c0_12, %c0_13] : memref<16x128xf32, #tpu.memory_space<vmem>>, vector<16x128xf32>
    tpu.vector_store %arg6[%c0_12, %c0_13], %14 {strides = array<i32>} : memref<16x128xf32, #tpu.memory_space<vmem>>, vector<16x128xf32>,
    return
  }
  func.func @transform_0(%arg0: i32) -> (i32, i32) {
    %c0_i32 = arith.constant 0 : i32
    %c0_i32_0 = arith.constant 0 : i32
    return %arg0, %c0_i32 : i32, i32
  }
  func.func @transform_1(%arg0: i32) -> (i32, i32) {
    %c0_i32 = arith.constant 0 : i32
    %c0_i32_0 = arith.constant 0 : i32
    %c0_i32_1 = arith.constant 0 : i32
    return %c0_i32, %c0_i32_0 : i32, i32
  }
  func.func @transform_2(%arg0: i32) -> (i32, i32) {
    %c0_i32 = arith.constant 0 : i32
    %c0_i32_0 = arith.constant 0 : i32
    %c0_i32_1 = arith.constant 0 : i32
    return %c0_i32, %c0_i32_0 : i32, i32
  }
  func.func @transform_3(%arg0: i32) -> (i32, i32) {
    %c0_i32 = arith.constant 0 : i32
    %c0_i32_0 = arith.constant 0 : i32
    %c0_i32_1 = arith.constant 0 : i32
    return %c0_i32, %c0_i32_0 : i32, i32
  }
  func.func @transform_4(%arg0: i32) -> (i32, i32) {
    %c0_i32 = arith.constant 0 : i32
    %c0_i32_0 = arith.constant 0 : i32
    %c0_i32_1 = arith.constant 0 : i32
    return %c0_i32, %c0_i32_0 : i32, i32
  }
  func.func @transform_5(%arg0: i32) -> (i32, i32) {
    %c0_i32 = arith.constant 0 : i32
    %c0_i32_0 = arith.constant 0 : i32
    return %arg0, %c0_i32 : i32, i32
  }
}

</mosaic_0001>

<llo_original>
// kernel: tpu_custom_call.1
$region0: #{tpu_custom_call.1}
  #allocation0 [shape = 'u32[]', space=smem, size = 0x4, offset = 0x4, fixed_abs, tag = 'smem constant byte address 0x4 - core index']
  #allocation1 [shape = 'u32[72,128]{1,0:T(1,128)}', space=vmem, size = 0x9000, scoped, tag = 'internal scratch']
  %s0 = inlined_call_operand.hbm [shape: f32[16,32], index: 0, kind: input, shape index: {}]
  %s1 = inlined_call_operand.hbm [shape: f32[32,128], index: 1, kind: input, shape index: {}]
  %s2 = inlined_call_operand.vmem [shape: f32[1,128], index: 2, kind: input, shape index: {}]
  %s3 = inlined_call_operand.hbm [shape: f32[128,128], index: 3, kind: input, shape index: {}]
  %s4 = inlined_call_operand.vmem [shape: f32[1,128], index: 4, kind: input, shape index: {}]
  %s5 = inlined_call_operand.hbm [shape: f32[16,128], index: 5, kind: output, shape index: {}]
  %s6 = sld [smem:[#allocation0]]
  $region42: #{tpu_custom_call.1} parent=0
    _
  %s8 = ssub.s32 1, %s6
  %s9 = scalar_select 0, %s8, %s6
  $region1: #{tpu_custom_call.1} parent=0
    #allocation2 [shape = 'u8[8192]{0}', space=vmem, size = 0x2000, scoped, tag = 'input window, operand 0, single buffered']
    #allocation3 [shape = 's32[1]{0}', space=sflag, size = 0x4, scoped, tag = 'scoped memory for tpu_custom_call.1']
    #allocation4 [shape = 's32[1]{0}', space=sflag, size = 0x4, scoped, tag = 'scoped memory for tpu_custom_call.1']
    #allocation5 [shape = 'u8[16384]{0}', space=vmem, size = 0x4000, scoped, tag = 'input window, operand 1, single buffered']
    #allocation6 [shape = 's32[1]{0}', space=sflag, size = 0x4, scoped, tag = 'scoped memory for tpu_custom_call.1']
    #allocation7 [shape = 'u8[65536]{0}', space=vmem, size = 0x10000, scoped, tag = 'input window, operand 3, single buffered']
    #allocation8 [shape = 'u8[8192]{0}', space=vmem, size = 0x2000, scoped, tag = 'output window, operand 0, single buffered']
    %10 = vsyncpa [#allocation3], 0
    %11 = vsyncpa [#allocation6], 0
    %12 = vsyncpa [#allocation4], 0
    // Predicated region
    $region2: #{tpu_custom_call.1} parent=1 // pred_check
      _
    $region3: #{tpu_custom_call.1} parent=1 // pred_check_branch
      %14 = sbr.rel (0) target = $region5
    $region4: #{tpu_custom_call.1} parent=1 // pred_region
      %16 = vsyncadd [#allocation3], 0
      %s17 = sshll.u32 %s0, 4
      %s18 = int_to_ptr.hbm [resolvable:$true] %s17
      %s19 = sshll.u32 [#allocation2], 4
      %s20 = int_to_ptr.vmem [resolvable:$true] %s19
      %25 = dma.hbm_to_vmem [thread:$0]  %s18, 256, %s20, [#allocation3], 128, 128, 8
    $region5: #{tpu_custom_call.1} parent=1 // pred_fallthru
      _
    // Predicated region
    $region6: #{tpu_custom_call.1} parent=1 // pred_check
      _
    $region7: #{tpu_custom_call.1} parent=1 // pred_check_branch
      %27 = sbr.rel (0) target = $region9
    $region8: #{tpu_custom_call.1} parent=1 // pred_region
      %29 = vsyncadd [#allocation6], 0
      %s30 = sshll.u32 %s1, 4
      %s31 = int_to_ptr.hbm [resolvable:$true] %s30
      %s32 = sshll.u32 [#allocation5], 4
      %s33 = int_to_ptr.vmem [resolvable:$true] %s32
      %38 = dma.hbm_to_vmem [thread:$0]  %s31, 512, %s33, [#allocation6], 128, 128, 8
    $region9: #{tpu_custom_call.1} parent=1 // pred_fallthru
      _
    // Predicated region
    $region10: #{tpu_custom_call.1} parent=1 // pred_check
      _
    $region11: #{tpu_custom_call.1} parent=1 // pred_check_branch
      %40 = sbr.rel (0) target = $region13
    $region12: #{tpu_custom_call.1} parent=1 // pred_region
      _
    $region13: #{tpu_custom_call.1} parent=1 // pred_fallthru
      _
    // Predicated region
    $region14: #{tpu_custom_call.1} parent=1 // pred_check
      _
    $region15: #{tpu_custom_call.1} parent=1 // pred_check_branch
      %42 = sbr.rel (0) target = $region17
    $region16: #{tpu_custom_call.1} parent=1 // pred_region
      %44 = vsyncadd [#allocation6], 0
      %s45 = sshll.u32 %s3, 4
      %s46 = int_to_ptr.hbm [resolvable:$true] %s45
      %s47 = sshll.u32 [#allocation7], 4
      %s48 = int_to_ptr.vmem [resolvable:$true] %s47
      %53 = dma.hbm_to_vmem [thread:$0]  %s46, 2048, %s48, [#allocation6], 128, 128, 8
    $region17: #{tpu_custom_call.1} parent=1 // pred_fallthru
      _
    // Predicated region
    $region18: #{tpu_custom_call.1} parent=1 // pred_check
      _
    $region19: #{tpu_custom_call.1} parent=1 // pred_check_branch
      %55 = sbr.rel (0) target = $region21
    $region20: #{tpu_custom_call.1} parent=1 // pred_region
      _
    $region21: #{tpu_custom_call.1} parent=1 // pred_fallthru
      _
    // Predicated region
    $region22: #{tpu_custom_call.1} parent=1 // pred_check
      _
    $region23: #{tpu_custom_call.1} parent=1 // pred_check_branch
      %57 = sbr.rel (0) target = $region25
    $region24: #{tpu_custom_call.1} parent=1 // pred_region
      %59 = dma.done [#allocation3], 256
    $region25: #{tpu_custom_call.1} parent=1 // pred_fallthru
      _
    // Predicated region
    $region26: #{tpu_custom_call.1} parent=1 // pred_check
      _
    $region27: #{tpu_custom_call.1} parent=1 // pred_check_branch
      %61 = sbr.rel (0) target = $region29
    $region28: #{tpu_custom_call.1} parent=1 // pred_region
      %63 = dma.done [#allocation6], 512
    $region29: #{tpu_custom_call.1} parent=1 // pred_fallthru
      _
    // Predicated region
    $region30: #{tpu_custom_call.1} parent=1 // pred_check
      _
    $region31: #{tpu_custom_call.1} parent=1 // pred_check_branch
      %65 = sbr.rel (0) target = $region33
    $region32: #{tpu_custom_call.1} parent=1 // pred_region
      %67 = dma.done [#allocation6], 2048
    $region33: #{tpu_custom_call.1} parent=1 // pred_fallthru
      _
    %v68 = vld [vmem:[#allocation2] sm:$0xff]
    %v69 = vld [vmem:[#allocation2 + $0x8] sm:$0xff]
    %v70 = vld [vmem:[#allocation5] sm:$0xff]
    %v71 = vld [vmem:[#allocation5 + $0x8] sm:$0xff]
    %v72 = vld [vmem:[#allocation5 + $0x10] sm:$0xff]
    %v73 = vld [vmem:[#allocation5 + $0x18] sm:$0xff]
    %v74 = vld [vmem:[%s2] sm:$0x1]
    %v76 = vperm.slane %v74, 0
    %vm78 = vcmask 261120
    %v80 = vsel %vm78, %v68, 0
    %v83 = vsel %vm78, %v69, 0
    %85 = vmatpush.msra.mxu0 0.0
    %86 = vmatpush.msra.mxu0 0.0
    %87 = vmatpush.msra.mxu0 0.0
    %88 = vmatpush.msra.mxu0 0.0
    %89 = vmatpush.msra.mxu0 0.0
    %90 = vmatpush.msra.mxu0 0.0
    %91 = vmatpush.msra.mxu0 0.0
    %92 = vmatpush.msra.mxu0 0.0
    %93 = vmatpush.msra.mxu0 0.0
    %94 = vmatpush.msra.mxu0 0.0
    %95 = vmatpush.msra.mxu0 0.0
    %96 = vmatpush.msra.mxu0 0.0
    %97 = vmatpush.msra.mxu0 %v73
    %98 = vmatpush.msra.mxu0 %v72
    %99 = vmatpush.msra.mxu0 %v71
    %100 = vmatpush.msra.mxu0 %v70
    %101 = vmatmul.f32.gmra.mxu0 %v80
    %v102 = vpop.f32.mrf.mxu0
    %v103 = vadd.f32 %v76, %v102
    %104 = vmatmul.f32.gmra.mxu0 %v83
    %v105 = vpop.f32.mrf.mxu0
    %v106 = vadd.f32 %v76, %v105
    %107 = vdwg.mxu0
    %v108 = vmax.f32 %v103, 0.0
    %v109 = vmax.f32 %v106, 0.0
    %v110 = vld [vmem:[#allocation7] sm:$0xff]
    %v111 = vld [vmem:[#allocation7 + $0x8] sm:$0xff]
    %v112 = vld [vmem:[#allocation7 + $0x10] sm:$0xff]
    %v113 = vld [vmem:[#allocation7 + $0x18] sm:$0xff]
    %v114 = vld [vmem:[#allocation7 + $0x20] sm:$0xff]
    %v115 = vld [vmem:[#allocation7 + $0x28] sm:$0xff]
    %v116 = vld [vmem:[#allocation7 + $0x30] sm:$0xff]
    %v117 = vld [vmem:[#allocation7 + $0x38] sm:$0xff]
    %v118 = vld [vmem:[#allocation7 + $0x40] sm:$0xff]
    %v119 = vld [vmem:[#allocation7 + $0x48] sm:$0xff]
    %v120 = vld [vmem:[#allocation7 + $0x50] sm:$0xff]
    %v121 = vld [vmem:[#allocation7 + $0x58] sm:$0xff]
    %v122 = vld [vmem:[#allocation7 + $0x60] sm:$0xff]
    %v123 = vld [vmem:[#allocation7 + $0x68] sm:$0xff]
    %v124 = vld [vmem:[#allocation7 + $0x70] sm:$0xff]
    %v125 = vld [vmem:[#allocation7 + $0x78] sm:$0xff]
    %v126 = vld [vmem:[%s4] sm:$0x1]
    %v128 = vperm.slane %v126, 0
    %130 = vmatpush.msra.mxu0 %v125
    %131 = vmatpush.msra.mxu0 %v124
    %132 = vmatpush.msra.mxu0 %v123
    %133 = vmatpush.msra.mxu0 %v122
    %134 = vmatpush.msra.mxu0 %v121
    %135 = vmatpush.msra.mxu0 %v120
    %136 = vmatpush.msra.mxu0 %v119
    %137 = vmatpush.msra.mxu0 %v118
    %138 = vmatpush.msra.mxu0 %v117
    %139 = vmatpush.msra.mxu0 %v116
    %140 = vmatpush.msra.mxu0 %v115
    %141 = vmatpush.msra.mxu0 %v114
    %142 = vmatpush.msra.mxu0 %v113
    %143 = vmatpush.msra.mxu0 %v112
    %144 = vmatpush.msra.mxu0 %v111
    %145 = vmatpush.msra.mxu0 %v110
    %146 = vmatmul.f32.gmra.mxu0 %v108
    %v147 = vpop.f32.mrf.mxu0
    %v148 = vadd.f32 %v128, %v147
    %149 = vmatmul.f32.gmra.mxu0 %v109
    %v150 = vpop.f32.mrf.mxu0
    %v151 = vadd.f32 %v128, %v150
    %152 = vdwg.mxu0
    %v153 = vmax.f32 %v148, 0.0
    %v154 = vmax.f32 %v151, 0.0
    %155 = vst [vmem:[#allocation8] sm:$0xff] %v153
    %156 = vst [vmem:[#allocation8 + $0x8] sm:$0xff] %v154
    // Predicated region
    $region34: #{tpu_custom_call.1} parent=1 // pred_check
      _
    $region35: #{tpu_custom_call.1} parent=1 // pred_check_branch
      %158 = sbr.rel (0) target = $region37
    $region36: #{tpu_custom_call.1} parent=1 // pred_region
      %160 = vsyncadd [#allocation4], 0
      %s161 = sshll.u32 [#allocation8], 4
      %s162 = int_to_ptr.vmem [resolvable:$true] %s161
      %s163 = sshll.u32 %s5, 4
      %s164 = int_to_ptr.hbm [resolvable:$true] %s163
      %169 = dma.vmem_to_hbm [thread:$0]  %s162, 256, %s164, [#allocation4], 128, 128, 8
    $region37: #{tpu_custom_call.1} parent=1 // pred_fallthru
      _
    // Predicated region
    $region38: #{tpu_custom_call.1} parent=1 // pred_check
      _
    $region39: #{tpu_custom_call.1} parent=1 // pred_check_branch
      %171 = sbr.rel (0) target = $region41
    $region40: #{tpu_custom_call.1} parent=1 // pred_region
      %173 = dma.done [#allocation4], 256
    $region41: #{tpu_custom_call.1} parent=1 // pred_fallthru
      _
    %174 = vsyncpa [#allocation3], 1
    %175 = vsyncpa [#allocation6], 1
    %176 = vsyncpa [#allocation4], 1

</llo_original>
